<compile_context>
chip_gen: v7x
topology: tpu7x:2x2x1
jax: 0.10.0
libtpu: 0.0.40
codegen_flags: <defaults>
</compile_context>

<pallas_src>
import jax
import jax.numpy as jnp
from jax import lax
from jax.experimental import pallas as pl
from jax.experimental.pallas import tpu as pltpu


# ----------------------------------------------------------------------------
# Pallas kernels
# ----------------------------------------------------------------------------

def _fusion_slab_kernel(fft_ref, multi_ref, w_ref, out_ref):
    """Whole-slab path: one grid step fuses nb full (C, HW) slabs.

    fft_ref / multi_ref / out_ref : (nb, C, HW) in VMEM
    w_ref : (4, C, C//4) = [w1_fft^T / HW, w1_multi^T / HW, w2_fft, w2_multi]
    """
    w1f_t = w_ref[0]          # (C, C//4), 1/HW already folded in
    w1m_t = w_ref[1]          # (C, C//4)
    w2f = w_ref[2]            # (C, C//4)
    w2m = w_ref[3]            # (C, C//4)

    # Global average pool as a sum (1/HW folded into w1).  First streaming
    # read of the refs; no full-slab f32 temporary is kept live.
    p_fft = jnp.sum(fft_ref[...].astype(jnp.float32), axis=-1, keepdims=True)
    p_multi = jnp.sum(multi_ref[...].astype(jnp.float32), axis=-1, keepdims=True)

    # Two-layer 1x1-conv MLP on the VPU/XLU: broadcast-multiply + reductions
    # (avoids degenerate (.,1)-RHS MXU dots and in-kernel concat / slices).
    h = ((p_fft * w1f_t[None]).sum(axis=1, keepdims=True)
         + (p_multi * w1m_t[None]).sum(axis=1, keepdims=True))   # (nb, 1, C//4)
    h = jnp.maximum(h, 0.0)
    attn_f = jax.nn.sigmoid((h * w2f[None]).sum(axis=-1, keepdims=True))  # (nb, C, 1)
    attn_m = jax.nn.sigmoid((h * w2m[None]).sum(axis=-1, keepdims=True))  # (nb, C, 1)

    # Second streaming read + single fused FMA store (lane-dense except a
    # possible <128-lane remainder, negligible when HW >> 128).
    out_ref[...] = (attn_f * fft_ref[...].astype(jnp.float32)
                    + attn_m * multi_ref[...].astype(jnp.float32)
                    ).astype(out_ref.dtype)


def _fusion_fma_kernel(attn_f_ref, attn_m_ref, fft_ref, multi_ref, out_ref):
    """Streaming-FMA fallback for very large slabs.

    attn_f_ref / attn_m_ref : (1, C, 1)  (precomputed in XLA)
    fft_ref / multi_ref / out_ref : (1, C, hw_tile)
    """
    af = attn_f_ref[...].astype(jnp.float32)
    am = attn_m_ref[...].astype(jnp.float32)
    out_ref[...] = (af * fft_ref[...].astype(jnp.float32)
                    + am * multi_ref[...].astype(jnp.float32)
                    ).astype(out_ref.dtype)


# ----------------------------------------------------------------------------
# Wrapper helpers
# ----------------------------------------------------------------------------

def _prepare_fusion_weights(w1, w2, hw_true):
    """Split w1/w2 into fft/multi halves, transpose w1, fold 1/HW into w1."""
    two_c = w1.shape[1]
    c = two_c // 2
    inv_hw = jnp.float32(1.0 / hw_true)
    w1f_t = (w1[:, :c].astype(jnp.float32) * inv_hw).T      # (C, C//4)
    w1m_t = (w1[:, c:].astype(jnp.float32) * inv_hw).T      # (C, C//4)
    w2f = w2[:c, :].astype(jnp.float32)                     # (C, C//4)
    w2m = w2[c:, :].astype(jnp.float32)                     # (C, C//4)
    return jnp.stack([w1f_t, w1m_t, w2f, w2m], axis=0)


def _usable_vmem_bytes():
    """~75% of the physical per-core VMEM (never request the full capacity)."""
    phys = 64 << 20                     # conservative default (v7x per TC)
    try:
        info = pltpu.get_tpu_info()
        phys = int(getattr(info, "vmem_capacity_bytes", phys))
    except Exception:
        pass
    # v5e/v6e: 128 MiB -> ~96 MiB usable; v7x: 64 MiB -> 48 MiB usable.
    return int(min(phys * 3 // 4, 100 << 20))


def _pick_nb(n, nb_cap):
    """Largest divisor of n <= nb_cap, keeping >= 2 grid steps when n allows
    so both v7x TensorCores get work on the 'parallel' grid axis."""
    nb_cap = max(1, int(nb_cap))
    best = 1
    for d in range(1, n + 1):
        if n % d or d > nb_cap:
            continue
        if n >= 2 and n // d < 2:
            continue
        best = d
    return best


def _pick_hw_tile(hw, c, in_bpe, target_bytes):
    """HW tile for the streaming-FMA path: multiple of 128 sized toward
    target_bytes per input block, or the full HW extent if it already fits."""
    t = (int(target_bytes) // max(c * in_bpe, 1)) // 128 * 128
    t = max(128, t)
    if t >= hw:
        return hw                       # full extent -> divisibility waived
    return int(t)


# ----------------------------------------------------------------------------
# ChannelFusionModule forward
# ----------------------------------------------------------------------------

def channel_fusion(fft_features, multi_features, w1, w2, *,
                   block_target_bytes=4 << 20,
                   stream_dtype=None,
                   fma_tile_bytes=4 << 20,
                   force_fma_path=False):
    """Pallas equivalent of ChannelFusionModule.forward.

    fft_features, multi_features: (N, C, H, W)
    w1: (C//4, 2C)   Conv2d(2C, C//4, 1, bias=False).weight squeezed
    w2: (2C, C//4)   Conv2d(C//4, 2C, 1, bias=False).weight squeezed
    stream_dtype: optional narrower dtype (e.g. jnp.bfloat16) used to stream
        the inputs through HBM; the kernel upcasts to f32 internally.
    """
    n, c, h, w = fft_features.shape
    hw = h * w
    out_dtype = fft_features.dtype

    fft3 = fft_features.reshape(n, c, hw)
    multi3 = multi_features.reshape(n, c, hw)
    if stream_dtype is not None and jnp.dtype(stream_dtype) != fft3.dtype:
        fft3 = fft3.astype(stream_dtype)
        multi3 = multi3.astype(stream_dtype)

    in_bpe = jnp.dtype(fft3.dtype).itemsize
    out_bpe = jnp.dtype(out_dtype).itemsize
    c_mid = w1.shape[0]
    w_bytes = 4 * c * c_mid * 4
    usable = _usable_vmem_bytes()

    # Per-batch VMEM footprint on the slab path: two double-buffered inputs,
    # one double-buffered output, plus one f32 block of headroom for temporaries.
    per_batch_step = 2 * (2 * c * hw * in_bpe + c * hw * out_bpe) + c * hw * 4
    slab_fits = per_batch_step + 2 * w_bytes + (4 << 20) <= usable

    if slab_fits and not force_fma_path:
        # -------- primary path: whole-slab fusion --------
        wts = _prepare_fusion_weights(w1, w2, hw)
        nb_cap = min(max(block_target_bytes // max(c * hw * in_bpe, 1), 1),
                     max((usable - 2 * w_bytes - (4 << 20)) // per_batch_step, 1))
        nb = _pick_nb(n, nb_cap)
        vmem_limit = int(min(max(nb * per_batch_step + 2 * w_bytes + (4 << 20),
                                 16 << 20), usable))
        out = pl.pallas_call(
            _fusion_slab_kernel,
            out_shape=jax.ShapeDtypeStruct((n, c, hw), out_dtype),
            grid_spec=pltpu.PrefetchScalarGridSpec(
                num_scalar_prefetch=0,
                grid=(n // nb,),
                in_specs=[
                    pl.BlockSpec((nb, c, hw), lambda i: (i, 0, 0)),
                    pl.BlockSpec((nb, c, hw), lambda i: (i, 0, 0)),
                    pl.BlockSpec(wts.shape, lambda i: (0, 0, 0)),
                ],
                out_specs=pl.BlockSpec((nb, c, hw), lambda i: (i, 0, 0)),
            ),
            compiler_params=pltpu.CompilerParams(
                dimension_semantics=("parallel",),
                vmem_limit_bytes=vmem_limit),
        )(fft3, multi3, wts)
    else:
        # -------- fallback: XLA pooling + tiny MLP, Pallas streaming FMA ----
        # The pooled reduce and 2-layer MLP are tiny and fuse into the
        # producers of the branch features; only the big FMA stream stays in
        # Pallas, tiled over HW with a pure "parallel" grid.
        inv_hw = jnp.float32(1.0 / hw)
        p_f = jnp.sum(fft3.astype(jnp.float32), axis=-1) * inv_hw      # (N, C)
        p_m = jnp.sum(multi3.astype(jnp.float32), axis=-1) * inv_hw    # (N, C)
        w1f = w1[:, :c].astype(jnp.float32)
        w1m = w1[:, c:].astype(jnp.float32)
        hidden = jnp.maximum(p_f @ w1f.T + p_m @ w1m.T, 0.0)           # (N, C//4)
        attn = jax.nn.sigmoid(hidden @ w2.astype(jnp.float32).T)       # (N, 2C)
        attn_f = attn[:, :c, None]                                     # (N, C, 1)
        attn_m = attn[:, c:, None]

        hw_tile = _pick_hw_tile(hw, c, in_bpe, fma_tile_bytes)
        n_tiles = pl.cdiv(hw, hw_tile)
        step_bytes = (2 * (2 * c * hw_tile * in_bpe + c * hw_tile * out_bpe)
                      + c * hw_tile * 4 + 4 * c * 4)
        vmem_limit = int(min(max(step_bytes + (4 << 20), 16 << 20), usable))
        out = pl.pallas_call(
            _fusion_fma_kernel,
            out_shape=jax.ShapeDtypeStruct((n, c, hw), out_dtype),
            grid_spec=pltpu.PrefetchScalarGridSpec(
                num_scalar_prefetch=0,
                grid=(n, n_tiles),
                in_specs=[
                    pl.BlockSpec((1, c, 1), lambda b, t: (b, 0, 0)),
                    pl.BlockSpec((1, c, 1), lambda b, t: (b, 0, 0)),
                    pl.BlockSpec((1, c, hw_tile), lambda b, t: (b, 0, t)),
                    pl.BlockSpec((1, c, hw_tile), lambda b, t: (b, 0, t)),
                ],
                out_specs=pl.BlockSpec((1, c, hw_tile), lambda b, t: (b, 0, t)),
            ),
            compiler_params=pltpu.CompilerParams(
                dimension_semantics=("parallel", "parallel"),
                vmem_limit_bytes=vmem_limit),
        )(attn_f, attn_m, fft3, multi3)

    return out.reshape(n, c, h, w)


# ----------------------------------------------------------------------------
# Full FFTConvCell forward (spectral + spatial branches stay as XLA ops)
# ----------------------------------------------------------------------------

_DN = ("NCHW", "OIHW", "NCHW")


def _fft_cell_features(x, params):
    """down_conv(x) and FourierConvolution(x)."""
    # TODO(synk): rfft2/irfft2, the spatial convolutions and BatchNorm have no
    # clean Pallas equivalent; they run as regular XLA ops (BN in inference mode).
    n, c_in, h, w = x.shape
    c_out = params["down_w"].shape[0]
    # The FourierConvolution real/imag split at c_in is only consistent when
    # in_channels == out_channels (same assumption as the PyTorch module).
    assert c_out == c_in, "FourierConvolution requires in_channels == out_channels"

    # down_conv: Conv2d(C_in, C_out, k, padding=k//2) with bias.
    x_int = lax.conv_general_dilated(x, params["down_w"], (1, 1), "SAME",
                                     dimension_numbers=_DN)
    x_int = x_int + params["down_b"][None, :, None, None]

    # FourierConvolution: rfft2 -> conv -> BN -> ReLU -> irfft2 (norm='forward').
    ff = jnp.fft.rfft2(x, norm="forward")                     # (N, C_in, H, W//2+1)
    ff = jnp.concatenate([ff.real, ff.imag], axis=1)          # torch.hstack == cat(dim=1)
    ff = lax.conv_general_dilated(ff, params["fft_w"], (1, 1), "SAME",
                                  dimension_numbers=_DN)
    ff = ff + params["fft_b"][None, :, None, None]
    scale = params["bn_gamma"] * lax.rsqrt(params["bn_var"] + 1e-5)
    ff = (ff - params["bn_mean"][None, :, None, None]) * scale[None, :, None, None]
    ff = ff + params["bn_beta"][None, :, None, None]
    ff = jnp.maximum(ff, 0.0)
    ff_c = lax.complex(ff[:, :c_in], ff[:, c_in:])
    x_fft = jnp.fft.irfft2(ff_c, s=(h, w), norm="forward")
    return x_fft, x_int


def fft_conv_cell(x, params):
    """FFTConvCell.forward."""
    x_fft, x_int = _fft_cell_features(x, params)
    return channel_fusion(x_fft, x_int, params["fc_w1"], params["fc_w2"])


def _fusion_reference(fft, multi, w1, w2):
    """Pure-JAX ChannelFusionModule reference mirroring the PyTorch forward."""
    combined = jnp.concatenate([fft, multi], axis=1)
    pooled = jnp.mean(combined, axis=(2, 3))
    hidden = jnp.maximum(pooled @ w1.T, 0.0)
    attn = jax.nn.sigmoid(hidden @ w2.T)
    c = fft.shape[1]
    return attn[:, :c, None, None] * fft + attn[:, c:, None, None] * multi


if __name__ == "__main__":
    N, C, H, W, K = 2, 8, 16, 16, 3
    key = jax.random.PRNGKey(0)
    ks = jax.random.split(key, 15)

    x = jax.random.normal(ks[0], (N, C, H, W), dtype=jnp.float32)
    params = {
        "down_w": 0.1 * jax.random.normal(ks[1], (C, C, K, K), jnp.float32),
        "down_b": 0.1 * jax.random.normal(ks[2], (C,), jnp.float32),
        "fft_w": 0.1 * jax.random.normal(ks[3], (2 * C, 2 * C, K, K), jnp.float32),
        "fft_b": 0.1 * jax.random.normal(ks[4], (2 * C,), jnp.float32),
        "bn_gamma": 1.0 + 0.1 * jax.random.normal(ks[5], (2 * C,), jnp.float32),
        "bn_beta": 0.1 * jax.random.normal(ks[6], (2 * C,), jnp.float32),
        "bn_mean": jnp.zeros((2 * C,), jnp.float32),
        "bn_var": jnp.ones((2 * C,), jnp.float32),
        "fc_w1": 0.1 * jax.random.normal(ks[7], (C // 4, 2 * C), jnp.float32),
        "fc_w2": 0.1 * jax.random.normal(ks[8], (2 * C, C // 4), jnp.float32),
    }

    # Full cell: Pallas fusion vs pure-JAX fusion on the same branch features.
    out = jax.block_until_ready(fft_conv_cell(x, params))
    x_fft, x_int = _fft_cell_features(x, params)
    ref = _fusion_reference(x_fft, x_int, params["fc_w1"], params["fc_w2"])
    assert out.shape == (N, C, H, W)
    assert jnp.allclose(out, ref, atol=1e-4, rtol=1e-4), "full-cell mismatch"

    # Slab path with H*W not a multiple of 128 (no pad/slice round-trip) and
    # batch packing (nb=2 over N=4).
    f2 = jax.random.normal(ks[9], (4, C, 10, 10), dtype=jnp.float32)
    m2 = jax.random.normal(ks[10], (4, C, 10, 10), dtype=jnp.float32)
    ref2 = _fusion_reference(f2, m2, params["fc_w1"], params["fc_w2"])
    out2 = jax.block_until_ready(
        channel_fusion(f2, m2, params["fc_w1"], params["fc_w2"]))
    assert jnp.allclose(out2, ref2, atol=1e-4, rtol=1e-4), "slab-path mismatch"

    # Slab path with bf16 streaming (halves input HBM bytes; looser tolerance).
    out2b = jax.block_until_ready(
        channel_fusion(f2, m2, params["fc_w1"], params["fc_w2"],
                       stream_dtype=jnp.bfloat16))
    assert jnp.allclose(out2b, ref2, atol=5e-2, rtol=5e-2), "bf16-stream mismatch"

    # Streaming-FMA fallback (forced), HW divisible by the 128-lane tile.
    f3 = jax.random.normal(ks[11], (3, C, 16, 24), dtype=jnp.float32)
    m3 = jax.random.normal(ks[12], (3, C, 16, 24), dtype=jnp.float32)
    ref3 = _fusion_reference(f3, m3, params["fc_w1"], params["fc_w2"])
    out3 = jax.block_until_ready(
        channel_fusion(f3, m3, params["fc_w1"], params["fc_w2"],
                       force_fma_path=True, fma_tile_bytes=4096))
    assert jnp.allclose(out3, ref3, atol=1e-4, rtol=1e-4), "fma-path mismatch"

    # Streaming-FMA fallback with a partial (masked) last HW tile.
    f4 = jax.random.normal(ks[13], (2, C, 16, 20), dtype=jnp.float32)
    m4 = jax.random.normal(ks[14], (2, C, 16, 20), dtype=jnp.float32)
    ref4 = _fusion_reference(f4, m4, params["fc_w1"], params["fc_w2"])
    out4 = jax.block_until_ready(
        channel_fusion(f4, m4, params["fc_w1"], params["fc_w2"],
                       force_fma_path=True, fma_tile_bytes=4096))
    assert jnp.allclose(out4, ref4, atol=1e-4, rtol=1e-4), "fma-masked mismatch"

    print("KERNEL_OK")
</pallas_src>

<mosaic_0001>
module attributes {stable_mosaic.version = 11 : i64} {
  func.func @_fusion_slab_kernel(%arg0: i32, %arg1: memref<1x8x256xf32, #tpu.memory_space<vmem>>, %arg2: memref<1x8x256xf32, #tpu.memory_space<vmem>>, %arg3: memref<4x8x2xf32, #tpu.memory_space<vmem>>, %arg4: memref<1x8x256xf32, #tpu.memory_space<vmem>>) attributes {dimension_semantics = [#tpu.dimension_semantics<parallel>], iteration_bounds = array<i64: 2>, scalar_prefetch = 0 : i64, scratch_operands = 0 : i64, tpu.core_type = #tpu.core_type<tc>, window_params = [{transform_indices = @transform_0, window_bounds = array<i64: 1, 8, 256>}, {transform_indices = @transform_1, window_bounds = array<i64: 1, 8, 256>}, {pipeline_mode = #tpu.pipeline_mode<synchronous>, transform_indices = @transform_2, window_bounds = array<i64: 4, 8, 2>}, {transform_indices = @transform_3, window_bounds = array<i64: 1, 8, 256>}]} {
    %c0 = arith.constant 0 : index
    %c0_0 = arith.constant 0 : index
    %c0_1 = arith.constant 0 : index
    %0 = vector.load %arg3[%c0, %c0_0, %c0_1] : memref<4x8x2xf32, #tpu.memory_space<vmem>>, vector<1x8x2xf32>
    %1 = vector.shape_cast %0 : vector<1x8x2xf32> to vector<8x2xf32>
    %c1 = arith.constant 1 : index
    %c0_2 = arith.constant 0 : index
    %c0_3 = arith.constant 0 : index
    %2 = vector.load %arg3[%c1, %c0_2, %c0_3] : memref<4x8x2xf32, #tpu.memory_space<vmem>>, vector<1x8x2xf32>
    %3 = vector.shape_cast %2 : vector<1x8x2xf32> to vector<8x2xf32>
    %c2 = arith.constant 2 : index
    %c0_4 = arith.constant 0 : index
    %c0_5 = arith.constant 0 : index
    %4 = vector.load %arg3[%c2, %c0_4, %c0_5] : memref<4x8x2xf32, #tpu.memory_space<vmem>>, vector<1x8x2xf32>
    %5 = vector.shape_cast %4 : vector<1x8x2xf32> to vector<8x2xf32>
    %c3 = arith.constant 3 : index
    %c0_6 = arith.constant 0 : index
    %c0_7 = arith.constant 0 : index
    %6 = vector.load %arg3[%c3, %c0_6, %c0_7] : memref<4x8x2xf32, #tpu.memory_space<vmem>>, vector<1x8x2xf32>
    %7 = vector.shape_cast %6 : vector<1x8x2xf32> to vector<8x2xf32>
    %c0_8 = arith.constant 0 : index
    %c0_9 = arith.constant 0 : index
    %c0_10 = arith.constant 0 : index
    %8 = vector.load %arg1[%c0_8, %c0_9, %c0_10] : memref<1x8x256xf32, #tpu.memory_space<vmem>>, vector<1x8x256xf32>
    %cst = arith.constant dense<0.000000e+00> : vector<1x8xf32>
    %9 = vector.multi_reduction <add>, %8, %cst [2] : vector<1x8x256xf32> to vector<1x8xf32>
    %10 = vector.shape_cast %9 : vector<1x8xf32> to vector<1x8x1xf32>
    %c0_11 = arith.constant 0 : index
    %c0_12 = arith.constant 0 : index
    %c0_13 = arith.constant 0 : index
    %11 = vector.load %arg2[%c0_11, %c0_12, %c0_13] : memref<1x8x256xf32, #tpu.memory_space<vmem>>, vector<1x8x256xf32>
    %cst_14 = arith.constant dense<0.000000e+00> : vector<1x8xf32>
    %12 = vector.multi_reduction <add>, %11, %cst_14 [2] : vector<1x8x256xf32> to vector<1x8xf32>
    %13 = vector.shape_cast %12 : vector<1x8xf32> to vector<1x8x1xf32>
    %14 = vector.shape_cast %1 : vector<8x2xf32> to vector<1x8x2xf32>
    %15 = vector.broadcast %10 : vector<1x8x1xf32> to vector<1x8x2xf32>
    %16 = arith.mulf %15, %14 : vector<1x8x2xf32>
    %cst_15 = arith.constant dense<0.000000e+00> : vector<1x2xf32>
    %17 = vector.multi_reduction <add>, %16, %cst_15 [1] : vector<1x8x2xf32> to vector<1x2xf32>
    %18 = vector.shape_cast %17 : vector<1x2xf32> to vector<1x1x2xf32>
    %19 = vector.shape_cast %3 : vector<8x2xf32> to vector<1x8x2xf32>
    %20 = vector.broadcast %13 : vector<1x8x1xf32> to vector<1x8x2xf32>
    %21 = arith.mulf %20, %19 : vector<1x8x2xf32>
    %cst_16 = arith.constant dense<0.000000e+00> : vector<1x2xf32>
    %22 = vector.multi_reduction <add>, %21, %cst_16 [1] : vector<1x8x2xf32> to vector<1x2xf32>
    %23 = vector.shape_cast %22 : vector<1x2xf32> to vector<1x1x2xf32>
    %24 = arith.addf %18, %23 : vector<1x1x2xf32>
    %cst_17 = arith.constant 0.000000e+00 : f32
    %25 = vector.broadcast %cst_17 : f32 to vector<1x1x2xf32>
    %26 = arith.maximumf %24, %25 : vector<1x1x2xf32>
    %27 = vector.shape_cast %5 : vector<8x2xf32> to vector<1x8x2xf32>
    %28 = vector.broadcast %26 : vector<1x1x2xf32> to vector<1x8x2xf32>
    %29 = arith.mulf %28, %27 : vector<1x8x2xf32>
    %cst_18 = arith.constant dense<0.000000e+00> : vector<1x8xf32>
    %30 = vector.multi_reduction <add>, %29, %cst_18 [2] : vector<1x8x2xf32> to vector<1x8xf32>
    %31 = vector.shape_cast %30 : vector<1x8xf32> to vector<1x8x1xf32>
    %32 = arith.negf %31 : vector<1x8x1xf32>
    %33 = math.exp %32 : vector<1x8x1xf32>
    %cst_19 = arith.constant 1.000000e+00 : f32
    %34 = vector.broadcast %cst_19 : f32 to vector<1x8x1xf32>
    %35 = arith.addf %34, %33 : vector<1x8x1xf32>
    %36 = arith.divf %34, %35 : vector<1x8x1xf32>
    %37 = vector.shape_cast %7 : vector<8x2xf32> to vector<1x8x2xf32>
    %38 = vector.broadcast %26 : vector<1x1x2xf32> to vector<1x8x2xf32>
    %39 = arith.mulf %38, %37 : vector<1x8x2xf32>
    %cst_20 = arith.constant dense<0.000000e+00> : vector<1x8xf32>
    %40 = vector.multi_reduction <add>, %39, %cst_20 [2] : vector<1x8x2xf32> to vector<1x8xf32>
    %41 = vector.shape_cast %40 : vector<1x8xf32> to vector<1x8x1xf32>
    %42 = arith.negf %41 : vector<1x8x1xf32>
    %43 = math.exp %42 : vector<1x8x1xf32>
    %cst_21 = arith.constant 1.000000e+00 : f32
    %44 = vector.broadcast %cst_21 : f32 to vector<1x8x1xf32>
    %45 = arith.addf %44, %43 : vector<1x8x1xf32>
    %46 = arith.divf %44, %45 : vector<1x8x1xf32>
    %c0_22 = arith.constant 0 : index
    %c0_23 = arith.constant 0 : index
    %c0_24 = arith.constant 0 : index
    %47 = vector.load %arg1[%c0_22, %c0_23, %c0_24] : memref<1x8x256xf32, #tpu.memory_space<vmem>>, vector<1x8x256xf32>
    %48 = vector.broadcast %36 : vector<1x8x1xf32> to vector<1x8x256xf32>
    %49 = arith.mulf %48, %47 : vector<1x8x256xf32>
    %c0_25 = arith.constant 0 : index
    %c0_26 = arith.constant 0 : index
    %c0_27 = arith.constant 0 : index
    %50 = vector.load %arg2[%c0_25, %c0_26, %c0_27] : memref<1x8x256xf32, #tpu.memory_space<vmem>>, vector<1x8x256xf32>
    %51 = vector.broadcast %46 : vector<1x8x1xf32> to vector<1x8x256xf32>
    %52 = arith.mulf %51, %50 : vector<1x8x256xf32>
    %53 = arith.addf %49, %52 : vector<1x8x256xf32>
    %c0_28 = arith.constant 0 : index
    %c0_29 = arith.constant 0 : index
    %c0_30 = arith.constant 0 : index
    %54 = vector.load %arg4[%c0_28, %c0_29, %c0_30] : memref<1x8x256xf32, #tpu.memory_space<vmem>>, vector<1x8x256xf32>
    tpu.vector_store %arg4[%c0_28, %c0_29, %c0_30], %53 {strides = array<i32>} : memref<1x8x256xf32, #tpu.memory_space<vmem>>, vector<1x8x256xf32>,
    return
  }
  func.func @transform_0(%arg0: i32) -> (i32, i32, i32) {
    %c0_i32 = arith.constant 0 : i32
    %c0_i32_0 = arith.constant 0 : i32
    %c0_i32_1 = arith.constant 0 : i32
    return %arg0, %c0_i32, %c0_i32_0 : i32, i32, i32
  }
  func.func @transform_1(%arg0: i32) -> (i32, i32, i32) {
    %c0_i32 = arith.constant 0 : i32
    %c0_i32_0 = arith.constant 0 : i32
    %c0_i32_1 = arith.constant 0 : i32
    return %arg0, %c0_i32, %c0_i32_0 : i32, i32, i32
  }
  func.func @transform_2(%arg0: i32) -> (i32, i32, i32) {
    %c0_i32 = arith.constant 0 : i32
    %c0_i32_0 = arith.constant 0 : i32
    %c0_i32_1 = arith.constant 0 : i32
    %c0_i32_2 = arith.constant 0 : i32
    return %c0_i32, %c0_i32_0, %c0_i32_1 : i32, i32, i32
  }
  func.func @transform_3(%arg0: i32) -> (i32, i32, i32) {
    %c0_i32 = arith.constant 0 : i32
    %c0_i32_0 = arith.constant 0 : i32
    %c0_i32_1 = arith.constant 0 : i32
    return %arg0, %c0_i32, %c0_i32_0 : i32, i32, i32
  }
}

</mosaic_0001>

<llo_original>
// kernel: tpu_custom_call.1
$region0: #{tpu_custom_call.1}
  #allocation0 [shape = 'u32[]', space=smem, size = 0x4, offset = 0x4, fixed_abs, tag = 'smem constant byte address 0x4 - core index']
  #allocation1 [shape = 'u32[144,128]{1,0:T(1,128)}', space=vmem, size = 0x12000, scoped, tag = 'internal scratch']
  %s0 = inlined_call_operand.vmem [shape: f32[2,8,256], index: 0, kind: input, shape index: {}]
  %s1 = inlined_call_operand.hbm [shape: f32[2,8,256], index: 1, kind: input, shape index: {}]
  %s2 = inlined_call_operand.vmem [shape: f32[4,8,2], index: 2, kind: input, shape index: {}]
  %s3 = inlined_call_operand.hbm [shape: f32[2,8,256], index: 3, kind: output, shape index: {}]
  %s4 = sld [smem:[#allocation0]]
  $region49: #{tpu_custom_call.1} parent=0
    _
  %s6 = ssub.s32 1, %s4
  %s7 = scalar_select 0, %s6, %s4
  $region1: #{tpu_custom_call.1} parent=0
    #allocation2 [shape = 'u8[16384]{0}', space=vmem, size = 0x4000, scoped, tag = 'input window, operand 1']
    #allocation3 [shape = 's32[2]{0}', space=sflag, size = 0x8, scoped, tag = 'scoped memory for tpu_custom_call.1']
    #allocation4 [shape = 's32[2]{0}', space=sflag, size = 0x8, scoped, tag = 'scoped memory for tpu_custom_call.1']
    #allocation5 [shape = 'u8[16384]{0}', space=vmem, size = 0x4000, scoped, tag = 'output window, operand 0']
    %8 = vsyncpa [#allocation3], 0
    %s9 = scalar_lea.sflag [#allocation3], 1
    %10 = vsyncpa %s9, 0
    %11 = vsyncpa [#allocation4], 0
    %s12 = scalar_lea.sflag [#allocation4], 1
    %13 = vsyncpa %s12, 0
    loop: start=0, step=1, limit=4
    $region2: #{tpu_custom_call.1} parent=1 // loop_pre_header
      _
    $region3: #{tpu_custom_call.1} parent=1 // loop_header
      %s15 = sphi 0, %s19
      %p16 = scmp.ge.s32.totalorder %s15, 4
      %s25 = sphi 0, %s27
      %s28 = sphi 0, %s25
      %s29 = sphi 0, %s28
      %s45 = sphi 0, %s29
      %s51 = sphi 0, %s53
      %s54 = sphi 0, %s51
      %s55 = sphi 0, %s54
      %s71 = sphi 0, %s55
      %s75 = sphi 0, %s75
      %s77 = sphi 0, %s75
      %s78 = sphi 0, %s77
      %s92 = sphi 0, %s78
      %s98 = sphi 0, %s100
      %s101 = sphi 0, %s98
      %s102 = sphi 0, %s101
      %s118 = sphi 0, %s102
    $region4: #{tpu_custom_call.1} parent=1 // loop_header_branch
      %18 = sbr.rel (%p16) target = $region8
    $region5: #{tpu_custom_call.1} parent=1 // loop_body
      %s20 = ssub.s32 %s15, 1
      %s21 = ssub.s32 %s15, 2
      %s22 = sadd.s32 %s15, 1
      %s23 = ssub.s32 %s15, %s22
      %p24 = scmp.eq.s32.totalorder %s23, 0
      %s26 = sadd.s32 %s25, 1
      %s27 = scalar_select %p24, %s25, %s26
      %p30 = pneg %p24
      %p31 = scmp.eq.s32.totalorder %s15, 1
      %p32 = por %p30, %p31
      %p33 = scmp.ne.s32.totalorder %s25, %s28
      %p34 = scmp.eq.s32.totalorder %s15, 0
      %p35 = por %p33, %p34
      %p36 = scmp.ne.s32.totalorder %s25, %s28
      %p37 = scmp.eq.s32.totalorder %s20, 1
      %p38 = por %p36, %p37
      %p39 = scmp.ne.s32.totalorder %s28, %s29
      %p40 = scmp.eq.s32.totalorder %s20, 0
      %p41 = por %p39, %p40
      %p42 = scmp.ne.s32.totalorder %s28, %s29
      %p43 = scmp.eq.s32.totalorder %s21, 1
      %p44 = por %p42, %p43
      %p46 = scmp.ne.s32.totalorder %s29, %s45
      %p47 = scmp.eq.s32.totalorder %s21, 0
      %p48 = por %p46, %p47
      %s49 = ssub.s32 %s15, %s22
      %p50 = scmp.eq.s32.totalorder %s49, 0
      %s52 = sadd.s32 %s51, 1
      %s53 = scalar_select %p50, %s51, %s52
      %p56 = pneg %p50
      %p57 = scmp.eq.s32.totalorder %s15, 1
      %p58 = por %p56, %p57
      %p59 = scmp.ne.s32.totalorder %s51, %s54
      %p60 = scmp.eq.s32.totalorder %s15, 0
      %p61 = por %p59, %p60
      %p62 = scmp.ne.s32.totalorder %s51, %s54
      %p63 = scmp.eq.s32.totalorder %s20, 1
      %p64 = por %p62, %p63
      %p65 = scmp.ne.s32.totalorder %s54, %s55
      %p66 = scmp.eq.s32.totalorder %s20, 0
      %p67 = por %p65, %p66
      %p68 = scmp.ne.s32.totalorder %s54, %s55
      %p69 = scmp.eq.s32.totalorder %s21, 1
      %p70 = por %p68, %p69
      %p72 = scmp.ne.s32.totalorder %s55, %s71
      %p73 = scmp.eq.s32.totalorder %s21, 0
      %p74 = por %p72, %p73
      %s76 = sadd.s32 %s75, 1
      %p79 = scmp.eq.s32.totalorder %s15, 1
      %p80 = scmp.ne.s32.totalorder %s75, %s77
      %p81 = scmp.eq.s32.totalorder %s15, 0
      %p82 = por %p80, %p81
      %p83 = scmp.ne.s32.totalorder %s75, %s77
      %p84 = scmp.eq.s32.totalorder %s20, 1
      %p85 = por %p83, %p84
      %p86 = scmp.ne.s32.totalorder %s77, %s78
      %p87 = scmp.eq.s32.totalorder %s20, 0
      %p88 = por %p86, %p87
      %p89 = scmp.ne.s32.totalorder %s77, %s78
      %p90 = scmp.eq.s32.totalorder %s21, 1
      %p91 = por %p89, %p90
      %p93 = scmp.ne.s32.totalorder %s78, %s92
      %p94 = scmp.eq.s32.totalorder %s21, 0
      %p95 = por %p93, %p94
      %s96 = ssub.s32 %s15, %s22
      %p97 = scmp.eq.s32.totalorder %s96, 0
      %s99 = sadd.s32 %s98, 1
      %s100 = scalar_select %p97, %s98, %s99
      %p103 = pneg %p97
      %p104 = scmp.eq.s32.totalorder %s15, 1
      %p105 = por %p103, %p104
      %p106 = scmp.ne.s32.totalorder %s98, %s101
      %p107 = scmp.eq.s32.totalorder %s15, 0
      %p108 = por %p106, %p107
      %p109 = scmp.ne.s32.totalorder %s98, %s101
      %p110 = scmp.eq.s32.totalorder %s20, 1
      %p111 = por %p109, %p110
      %p112 = scmp.ne.s32.totalorder %s101, %s102
      %p113 = scmp.eq.s32.totalorder %s20, 0
      %p114 = por %p112, %p113
      %p115 = scmp.ne.s32.totalorder %s101, %s102
      %p116 = scmp.eq.s32.totalorder %s21, 1
      %p117 = por %p115, %p116
      %p119 = scmp.ne.s32.totalorder %s102, %s118
      %p120 = scmp.eq.s32.totalorder %s21, 0
      %p121 = por %p119, %p120
      %p122 = scmp.le.s32.totalorder 1, %s15
      %p123 = scmp.lt.s32.totalorder %s15, 3
      %p124 = pnand %p122, %p123
      %p125 = pneg %p124
      // Predicated region
      $region9: #{tpu_custom_call.1} parent=5 // pred_check
        _
      $region10: #{tpu_custom_call.1} parent=5 // pred_check_branch
        %127 = sbr.rel (%p124) target = $region12
      $region11: #{tpu_custom_call.1} parent=5 // pred_region
        %s128 = ssub.s32 %s15, 1
        // Predicated region
        $region13: #{tpu_custom_call.1} parent=11 // pred_check
          %p129 = pneg %p88
        $region14: #{tpu_custom_call.1} parent=11 // pred_check_branch
          %131 = sbr.rel (%p129) target = $region16
        $region15: #{tpu_custom_call.1} parent=11 // pred_region
          _
        $region16: #{tpu_custom_call.1} parent=11 // pred_fallthru
          _
      $region12: #{tpu_custom_call.1} parent=5 // pred_fallthru
        _
      %p132 = scmp.lt.s32.totalorder %s15, 2
      // Predicated region
      $region17: #{tpu_custom_call.1} parent=5 // pred_check
        %p133 = pneg %p132
      $region18: #{tpu_custom_call.1} parent=5 // pred_check_branch
        %135 = sbr.rel (%p133) target = $region20
      $region19: #{tpu_custom_call.1} parent=5 // pred_region
        // Predicated region
        $region21: #{tpu_custom_call.1} parent=19 // pred_check
          %p136 = pneg %p35
        $region22: #{tpu_custom_call.1} parent=19 // pred_check_branch
          %138 = sbr.rel (%p136) target = $region24
        $region23: #{tpu_custom_call.1} parent=19 // pred_region
          %p139 = scmp.lt.s32.totalorder %s15, 1
          %s140 = scalar_select %p139, %s15, 1
          %s141 = smul.addr %s140, 2
          %s142 = smul.addr %s141, 8
          %s143 = scalar_lea.vmem %s0, %s142
        $region24: #{tpu_custom_call.1} parent=19 // pred_fallthru
          _
        // Predicated region
        $region25: #{tpu_custom_call.1} parent=19 // pred_check
          %p144 = pneg %p61
        $region26: #{tpu_custom_call.1} parent=19 // pred_check_branch
          %146 = sbr.rel (%p144) target = $region28
        $region27: #{tpu_custom_call.1} parent=19 // pred_region
          %s147 = sand.u32 %s51, 1
          %s148 = scalar_lea.sflag [#allocation3], %s147
          %s149 = sand.u32 %s51, 1
          %s150 = smul.addr %s149, 16
          %s151 = scalar_lea.vmem [#allocation2], %s150
          %s153 = ssub.s32 256, 256
          %154 = vsyncadd %s148, %s153
          %s155 = smul.addr %s15, 2
          %s156 = smul.addr %s155, 128
          %s157 = scalar_lea.hbm %s1, %s156
          %s159 = sshll.u32 %s151, 4
          %s160 = int_to_ptr.vmem [resolvable:$true] %s159
          %162 = dma.hbm_to_vmem [thread:$0]  %s157, 256, %s160, %s148
        $region28: #{tpu_custom_call.1} parent=19 // pred_fallthru
          _
      $region20: #{tpu_custom_call.1} parent=5 // pred_fallthru
        _
      %p163 = scmp.le.s32.totalorder 1, %s15
      %p164 = scmp.lt.s32.totalorder %s15, 3
      %p165 = pnand %p163, %p164
      %p166 = pneg %p165
      // Predicated region
      $region29: #{tpu_custom_call.1} parent=5 // pred_check
        _
      $region30: #{tpu_custom_call.1} parent=5 // pred_check_branch
        %168 = sbr.rel (%p165) target = $region32
      $region31: #{tpu_custom_call.1} parent=5 // pred_region
        %s169 = ssub.s32 %s15, 1
        %s170 = sand.u32 %s54, 1
        %s171 = scalar_lea.sflag [#allocation3], %s170
        %s172 = sand.u32 %s54, 1
        %s173 = smul.addr %s172, 16
        %s174 = scalar_lea.vmem [#allocation2], %s173
        // Predicated region
        $region33: #{tpu_custom_call.1} parent=31 // pred_check
          %p175 = pneg %p67
        $region34: #{tpu_custom_call.1} parent=31 // pred_check_branch
          %177 = sbr.rel (%p175) target = $region36
        $region35: #{tpu_custom_call.1} parent=31 // pred_region
          %178 = dma.done %s171, 256
        $region36: #{tpu_custom_call.1} parent=31 // pred_fallthru
          _
        %p179 = scmp.lt.s32.totalorder %s20, 1
        %s180 = scalar_select %p179, %s20, 1
        %s181 = smul.addr %s180, 2
        %s182 = smul.addr %s181, 8
        %s183 = scalar_lea.vmem %s0, %s182
        %p184 = pneg %p41
        %p185 = pneg %p38
        %s186 = sand.u32 %s54, 1
        %s187 = scalar_lea.sflag [#allocation3], %s186
        %s188 = sand.u32 %s54, 1
        %s189 = smul.addr %s188, 16
        %s190 = scalar_lea.vmem [#allocation2], %s189
        %p191 = pneg %p67
        %p192 = pneg %p64
        %p193 = pneg %p88
        %p194 = pneg %p85
        %p195 = pneg %p114
        %p196 = pneg %p111
        %s197 = sand.u32 %s101, 1
        %s198 = scalar_lea.sflag [#allocation4], %s197
        %s199 = sand.u32 %s101, 1
        %s200 = smul.addr %s199, 16
        %s201 = scalar_lea.vmem [#allocation5], %s200
        %p202 = scmp.lt.s32.totalorder %s20, 1
        %s203 = scalar_select %p202, %s20, 1
        %s204 = smul.addr %s203, 2
        %s205 = smul.addr %s204, 8
        %s206 = scalar_lea.vmem %s0, %s205
        %v207 = vld [vmem:[%s2] sm:$0xff]
        %s208 = scalar_lea.vmem %s2, 8
        %v209 = vld [vmem:[%s208] sm:$0xff]
        %s210 = scalar_lea.vmem %s2, 16
        %v211 = vld [vmem:[%s210] sm:$0xff]
        %s212 = scalar_lea.vmem %s2, 24
        %v213 = vld [vmem:[%s212] sm:$0xff]
        %v214 = vld [vmem:[%s206] sm:$0xff]
        %v215 = vld [vmem:[%s206 + $0x8] sm:$0xff]
        %v216 = vadd.f32 %v214, %v215
        %217 = vadd.xlane.f32.xlu0 %v216
        %v218 = vpop.xlane.xlu0 %217
        %v219 = vld [vmem:[%s174] sm:$0xff]
        %v220 = vld [vmem:[%s174 + $0x8] sm:$0xff]
        %v221 = vadd.f32 %v219, %v220
        %222 = vadd.xlane.f32.xlu0 %v221
        %v223 = vpop.xlane.xlu0 %222
        %v224 = vmul.f32 %v218, %v207
        %vm225 = vcmask 15360
        %v226 = vsel %vm225, %v224, 0.0
        %v227 = vrot.slane %v226, 4
        %v228 = vadd.f32 %v226, %v227
        %v229 = vrot.slane %v228, 2
        %v230 = vadd.f32 %v228, %v229
        %v231 = vrot.slane %v230, 1
        %v232 = vadd.f32 %v230, %v231
        %v233 = vmul.f32 %v223, %v209
        %v234 = vsel %vm225, %v233, 0.0
        %v235 = vrot.slane %v234, 4
        %v236 = vadd.f32 %v234, %v235
        %v237 = vrot.slane %v236, 2
        %v238 = vadd.f32 %v236, %v237
        %v239 = vrot.slane %v238, 1
        %v240 = vadd.f32 %v238, %v239
        %v241 = vadd.f32 %v232, %v240
        %v242 = vmax.f32 %v241, 0.0
        %v243 = vmul.f32 %v242, %v211
        %v244 = vsel %vm225, %v243, 0.0
        %245 = vadd.xlane.f32.xlu0 %v244
        %v246 = vpop.xlane.xlu0 %245
        %v247 = vxor.u32 %v246, 2147483648
        %v248 = vmul.f32 %v247, 1.442695
        %v249 = vpow.pop %v248
        %v250 = vadd.f32 %v249, 1.0
        %v251 = vrcp.pop %v250
        %v252 = vmul.f32 1.0, %v251
        %v253 = vmul.f32 %v242, %v213
        %v254 = vsel %vm225, %v253, 0.0
        %255 = vadd.xlane.f32.xlu0 %v254
        %v256 = vpop.xlane.xlu0 %255
        %v257 = vxor.u32 %v256, 2147483648
        %v258 = vmul.f32 %v257, 1.442695
        %v259 = vpow.pop %v258
        %v260 = vadd.f32 %v259, 1.0
        %v261 = vrcp.pop %v260
        %v262 = vmul.f32 1.0, %v261
        %v263 = vmul.f32 %v252, %v214
        %v264 = vmul.f32 %v252, %v215
        %v265 = vmul.f32 %v262, %v219
        %v266 = vmul.f32 %v262, %v220
        %v267 = vadd.f32 %v263, %v265
        %v268 = vadd.f32 %v264, %v266
        %269 = vst [vmem:[%s201] sm:$0xff] %v267
        %270 = vst [vmem:[%s201 + $0x8] sm:$0xff] %v268
        %s271 = sand.u32 %s101, 1
        %s272 = scalar_lea.sflag [#allocation4], %s271
        %s273 = sand.u32 %s101, 1
        %s274 = smul.addr %s273, 16
        %s275 = scalar_lea.vmem [#allocation5], %s274
        // Predicated region
        $region37: #{tpu_custom_call.1} parent=31 // pred_check
          %p276 = pneg %p111
        $region38: #{tpu_custom_call.1} parent=31 // pred_check_branch
          %278 = sbr.rel (%p276) target = $region40
        $region39: #{tpu_custom_call.1} parent=31 // pred_region
          %s280 = ssub.s32 256, 256
          %281 = vsyncadd %s272, %s280
          %s282 = smul.addr %s20, 2
          %s283 = smul.addr %s282, 128
          %s284 = scalar_lea.hbm %s3, %s283
          %s286 = sshll.u32 %s275, 4
          %s287 = int_to_ptr.vmem [resolvable:$true] %s286
          %289 = dma.vmem_to_hbm [thread:$0]  %s287, 256, %s284, %s272
        $region40: #{tpu_custom_call.1} parent=31 // pred_fallthru
          _
      $region32: #{tpu_custom_call.1} parent=5 // pred_fallthru
        _
      %p290 = scmp.le.s32.totalorder 2, %s15
      // Predicated region
      $region41: #{tpu_custom_call.1} parent=5 // pred_check
        %p291 = pneg %p290
      $region42: #{tpu_custom_call.1} parent=5 // pred_check_branch
        %293 = sbr.rel (%p291) target = $region44
      $region43: #{tpu_custom_call.1} parent=5 // pred_region
        %s294 = ssub.s32 %s15, 2
        // Predicated region
        $region45: #{tpu_custom_call.1} parent=43 // pred_check
          %p295 = pneg %p117
        $region46: #{tpu_custom_call.1} parent=43 // pred_check_branch
          %297 = sbr.rel (%p295) target = $region48
        $region47: #{tpu_custom_call.1} parent=43 // pred_region
          %s298 = sand.u32 %s102, 1
          %s299 = scalar_lea.sflag [#allocation4], %s298
          %s300 = sand.u32 %s102, 1
          %s301 = smul.addr %s300, 16
          %s302 = scalar_lea.vmem [#allocation5], %s301
          %303 = dma.done %s299, 256
        $region48: #{tpu_custom_call.1} parent=43 // pred_fallthru
          _
      $region44: #{tpu_custom_call.1} parent=5 // pred_fallthru
        _
    $region6: #{tpu_custom_call.1} parent=1 // loop_footer
      %s19 = sadd.s32 1, %s15
    $region7: #{tpu_custom_call.1} parent=1 // loop_footer_branch
      %14 = sbr.rel target = $region3
    $region8: #{tpu_custom_call.1} parent=1 // loop_exit
      _
    %304 = vsyncpa [#allocation3], 1
    %s305 = scalar_lea.sflag [#allocation3], 1
    %306 = vsyncpa %s305, 1
    %307 = vsyncpa [#allocation4], 1
    %s308 = scalar_lea.sflag [#allocation4], 1
    %309 = vsyncpa %s308, 1

</llo_original>
